<compile_context>
chip_gen: v7x
topology: tpu7x:2x2x1
jax: 0.10.0
libtpu: 0.0.40
codegen_flags: <defaults>
</compile_context>

<pallas_src>
import jax
import jax.numpy as jnp
from jax.experimental import pallas as pl
from jax.experimental.pallas import tpu as pltpu


def _round_up(x, m):
    return ((x + m - 1) // m) * m


def _leaky_relu(x, slope=0.2):
    return jnp.where(x >= 0, x, slope * x)


# ---------------------------------------------------------------------------
# Kernel
# ---------------------------------------------------------------------------
def mlp_kernel(x_ref,
               w1_ref, b1_ref,
               w2_ref, b2_ref,
               w3_ref, b3_ref,
               w4_ref, b4_ref,
               o_ref,
               acc_ref):
    k = pl.program_id(1)

    # Layer-1 partial product for this K slab (MXU, f32 accumulation).
    # x is streamed in its HBM dtype (f32) and cast in-VMEM to the MXU dtype.
    partial = jnp.dot(x_ref[...].astype(w1_ref.dtype), w1_ref[...],
                      preferred_element_type=jnp.float32)

    @pl.when(k == 0)
    def _():
        acc_ref[...] = partial          # direct store: no zero-init + RMW

    @pl.when(k > 0)
    def _():
        acc_ref[...] += partial

    @pl.when(k == pl.num_programs(1) - 1)
    def _():
        # Finalize layer 1 and fuse layers 2-4 (all weights VMEM-resident).
        h1 = _leaky_relu(acc_ref[...] + b1_ref[...])                     # f32
        h2 = _leaky_relu(jnp.dot(h1.astype(w2_ref.dtype), w2_ref[...],
                                 preferred_element_type=jnp.float32) + b2_ref[...])
        h3 = _leaky_relu(jnp.dot(h2.astype(w3_ref.dtype), w3_ref[...],
                                 preferred_element_type=jnp.float32) + b3_ref[...])
        # Final layer (out_features=1): VPU multiply + lane reduction, not MXU.
        score = jnp.sum(h3 * w4_ref[...], axis=-1, keepdims=True) + b4_ref[0]
        o_ref[...] = score.astype(o_ref.dtype)


# ---------------------------------------------------------------------------
# One-time parameter preparation (cast / pad weights once, not per forward)
# ---------------------------------------------------------------------------
def prepare_params(params, *, in_features, compute_dtype=jnp.bfloat16,
                   max_tile_k=4096):
    assert max_tile_k % 128 == 0
    (w1, b1), (w2, b2), (w3, b3), (w4, b4) = params
    F = in_features

    if F <= max_tile_k:
        tk, F_pad = F, F
    else:
        tk = max_tile_k
        F_pad = _round_up(F, tk)

    w1c = w1.astype(compute_dtype)
    if F_pad != F:
        # Zero rows add nothing to the K reduction.
        w1c = jnp.pad(w1c, ((0, F_pad - F), (0, 0)))

    return dict(
        w1=w1c,
        b1=b1.reshape(1, -1).astype(jnp.float32),
        w2=w2.astype(compute_dtype),
        b2=b2.reshape(1, -1).astype(jnp.float32),
        w3=w3.astype(compute_dtype),
        b3=b3.reshape(1, -1).astype(jnp.float32),
        w4=w4.reshape(1, -1).astype(jnp.float32),   # (1, 128) VPU row
        b4=b4.reshape(-1).astype(jnp.float32),      # (1,)  -> SMEM scalar
        F=F, F_pad=F_pad, tk=tk,
    )


# ---------------------------------------------------------------------------
# VMEM budgeting
# ---------------------------------------------------------------------------
def _vmem_capacity_bytes():
    try:
        info = pltpu.get_tpu_info()
        cap = getattr(info, "vmem_capacity_bytes", None)
        if cap:
            return int(cap)
    except Exception:
        pass
    return 64 * 1024 * 1024     # conservative: v7x per-TC VMEM


def _footprint_bytes(tb, tk, x_itemsize, w_itemsize):
    return (2 * tb * tk * x_itemsize                    # x tile, double-buffered
            + 2 * tk * 512 * w_itemsize                 # W1 slab, double-buffered
            + tb * 512 * 4                              # f32 accumulator
            + 2 * (512 * 256 + 256 * 128) * w_itemsize  # resident W2 / W3
            + 2 * 8 * (512 + 256 + 128 + 128) * 4       # biases + W4 row (padded)
            + 2 * tb * 128 * 4)                         # output tile (lane-padded)


# ---------------------------------------------------------------------------
# Forward
# ---------------------------------------------------------------------------
def linear_discriminator_forward(model_input, prepared, *, batch_size,
                                 tile_b=512):
    """Forward pass of LinearDiscriminator as one fused Pallas kernel."""
    F, F_pad, tk = prepared["F"], prepared["F_pad"], prepared["tk"]
    x = model_input.reshape(batch_size, F)      # torch .view equivalent

    x_itemsize = jnp.dtype(x.dtype).itemsize
    w_itemsize = jnp.dtype(prepared["w1"].dtype).itemsize

    # ---- batch tiling (sublane-aligned) ----
    B = batch_size
    B8 = _round_up(B, 8)
    tb = min(_round_up(tile_b, 8), B8)

    # Shrink tb until the tile footprint fits the VMEM budget.
    cap = _vmem_capacity_bytes()
    budget = (cap * 5) // 8
    while tb > 8 and _footprint_bytes(tb, tk, x_itemsize, w_itemsize) > budget:
        tb = max(8, _round_up(tb // 2, 8))

    # Prefer >= 2 batch tiles so the "parallel" axis can shard across v7x's
    # two TensorCores (only shrinks tb, never grows it).
    if B8 // tb < 2 and B8 >= 16:
        tb = _round_up((B8 + 1) // 2, 8)

    B_pad = _round_up(B, tb)
    pad_b = B_pad - B
    pad_f = F_pad - F
    if pad_b or pad_f:
        x = jnp.pad(x, ((0, pad_b), (0, pad_f)))

    n_b = B_pad // tb
    n_k = F_pad // tk

    footprint = _footprint_bytes(tb, tk, x_itemsize, w_itemsize)
    vmem_limit = max(32 * 1024 * 1024, min(2 * footprint, budget))

    const = lambda i, k: (0, 0)

    out = pl.pallas_call(
        mlp_kernel,
        out_shape=jax.ShapeDtypeStruct((B_pad, 1), jnp.float32),
        grid_spec=pltpu.PrefetchScalarGridSpec(
            num_scalar_prefetch=0,
            grid=(n_b, n_k),
            in_specs=[
                pl.BlockSpec((tb, tk), lambda i, k: (i, k)),    # x tile (f32)
                pl.BlockSpec((tk, 512), lambda i, k: (k, 0)),   # W1 K-slab
                pl.BlockSpec((1, 512), const),                  # b1 (resident)
                pl.BlockSpec((512, 256), const),                # W2 (resident)
                pl.BlockSpec((1, 256), const),                  # b2
                pl.BlockSpec((256, 128), const),                # W3 (resident)
                pl.BlockSpec((1, 128), const),                  # b3
                pl.BlockSpec((1, 128), const),                  # W4 as row
                pl.BlockSpec(memory_space=pltpu.MemorySpace.SMEM),  # b4 scalar
            ],
            out_specs=pl.BlockSpec((tb, 1), lambda i, k: (i, 0)),
            scratch_shapes=[pltpu.VMEM((tb, 512), jnp.float32)],
        ),
        compiler_params=pltpu.CompilerParams(
            dimension_semantics=("parallel", "arbitrary"),
            vmem_limit_bytes=int(vmem_limit),
        ),
    )(x,
      prepared["w1"], prepared["b1"],
      prepared["w2"], prepared["b2"],
      prepared["w3"], prepared["b3"],
      prepared["w4"], prepared["b4"])

    return out[:B]


# ---------------------------------------------------------------------------
# Reference / init helpers
# ---------------------------------------------------------------------------
def init_params(key, in_features):
    """Deterministic init mimicking nn.Linear (uniform(-1/sqrt(fan_in), +))."""
    dims = [(in_features, 512), (512, 256), (256, 128), (128, 1)]
    params = []
    for i, (fi, fo) in enumerate(dims):
        kw, kb = jax.random.split(jax.random.fold_in(key, i))
        bound = 1.0 / (fi ** 0.5)
        w = jax.random.uniform(kw, (fi, fo), jnp.float32, -bound, bound)
        b = jax.random.uniform(kb, (fo,), jnp.float32, -bound, bound)
        params.append((w, b))
    return params


def reference_forward(model_input, params, *, batch_size, seq_len, graph_size,
                      feature_channels):
    F = seq_len * graph_size * feature_channels
    h = model_input.reshape(batch_size, F)
    for i, (w, b) in enumerate(params):
        h = h @ w + b
        if i < len(params) - 1:
            h = jnp.where(h >= 0, h, 0.2 * h)
    return h


if __name__ == "__main__":
    key = jax.random.PRNGKey(0)

    # ---- Test 1: nominal small shapes, exact f32 MXU path, default tiles ----
    bs, sl, gs, fc = 2, 8, 4, 4           # F = 128
    k_in, k_p = jax.random.split(jax.random.fold_in(key, 1))
    x1 = jax.random.normal(k_in, (bs, sl, gs, fc), jnp.float32)
    p1 = init_params(k_p, sl * gs * fc)
    prep1 = prepare_params(p1, in_features=sl * gs * fc,
                           compute_dtype=jnp.float32)

    s1 = linear_discriminator_forward(x1, prep1, batch_size=bs)
    s1 = jax.block_until_ready(s1)
    r1 = reference_forward(x1, p1, batch_size=bs, seq_len=sl,
                           graph_size=gs, feature_channels=fc)
    assert s1.shape == (bs, 1), s1.shape
    assert jnp.allclose(s1, r1, atol=1e-5, rtol=1e-5), (s1, r1)

    # ---- Test 2: ragged batch tiling + K tiling + bf16 MXU operands ----
    bs2, sl2, gs2, fc2 = 20, 8, 8, 8      # F = 512, B=20 -> 3 batch tiles (tb=8)
    k_in2, k_p2 = jax.random.split(jax.random.fold_in(key, 2))
    x2 = jax.random.normal(k_in2, (bs2, sl2, gs2, fc2), jnp.float32)
    p2 = init_params(k_p2, sl2 * gs2 * fc2)
    prep2 = prepare_params(p2, in_features=sl2 * gs2 * fc2,
                           compute_dtype=jnp.bfloat16, max_tile_k=256)

    s2 = linear_discriminator_forward(x2, prep2, batch_size=bs2, tile_b=8)
    s2 = jax.block_until_ready(s2)
    r2 = reference_forward(x2, p2, batch_size=bs2, seq_len=sl2,
                           graph_size=gs2, feature_channels=fc2)
    assert s2.shape == (bs2, 1), s2.shape
    assert jnp.allclose(s2, r2, atol=1e-1, rtol=1e-1), (s2, r2)

    print("KERNEL_OK")
</pallas_src>

<mosaic_0001>
module attributes {stable_mosaic.version = 11 : i64} {
  func.func @mlp_kernel(%arg0: i32, %arg1: i32, %arg2: memref<8x128xf32, #tpu.memory_space<vmem>>, %arg3: memref<128x512xf32, #tpu.memory_space<vmem>>, %arg4: memref<1x512xf32, #tpu.memory_space<vmem>>, %arg5: memref<512x256xf32, #tpu.memory_space<vmem>>, %arg6: memref<1x256xf32, #tpu.memory_space<vmem>>, %arg7: memref<256x128xf32, #tpu.memory_space<vmem>>, %arg8: memref<1x128xf32, #tpu.memory_space<vmem>>, %arg9: memref<1x128xf32, #tpu.memory_space<vmem>>, %arg10: memref<1xf32, #tpu.memory_space<smem>>, %arg11: memref<8x1xf32, #tpu.memory_space<vmem>>, %arg12: memref<8x512xf32, #tpu.memory_space<vmem>>) attributes {dimension_semantics = [#tpu.dimension_semantics<parallel>, #tpu.dimension_semantics<arbitrary>], iteration_bounds = array<i64: 1, 1>, scalar_prefetch = 0 : i64, scratch_operands = 1 : i64, tpu.core_type = #tpu.core_type<tc>, window_params = [{transform_indices = @transform_0, window_bounds = array<i64: 8, 128>}, {transform_indices = @transform_1, window_bounds = array<i64: 128, 512>}, {pipeline_mode = #tpu.pipeline_mode<synchronous>, transform_indices = @transform_2, window_bounds = array<i64: 1, 512>}, {pipeline_mode = #tpu.pipeline_mode<synchronous>, transform_indices = @transform_3, window_bounds = array<i64: 512, 256>}, {pipeline_mode = #tpu.pipeline_mode<synchronous>, transform_indices = @transform_4, window_bounds = array<i64: 1, 256>}, {pipeline_mode = #tpu.pipeline_mode<synchronous>, transform_indices = @transform_5, window_bounds = array<i64: 256, 128>}, {pipeline_mode = #tpu.pipeline_mode<synchronous>, transform_indices = @transform_6, window_bounds = array<i64: 1, 128>}, {pipeline_mode = #tpu.pipeline_mode<synchronous>, transform_indices = @transform_7, window_bounds = array<i64: 1, 128>}, {transform_indices = @transform_8, window_bounds = array<i64: 1>}, {transform_indices = @transform_9, window_bounds = array<i64: 8, 1>}]} {
    %c0 = arith.constant 0 : index
    %c0_0 = arith.constant 0 : index
    %0 = vector.load %arg2[%c0, %c0_0] : memref<8x128xf32, #tpu.memory_space<vmem>>, vector<8x128xf32>
    %c0_1 = arith.constant 0 : index
    %c0_2 = arith.constant 0 : index
    %1 = vector.load %arg3[%c0_1, %c0_2] : memref<128x512xf32, #tpu.memory_space<vmem>>, vector<128x512xf32>
    %cst = arith.constant dense<0.000000e+00> : vector<8x512xf32>
    %2 = tpu.matmul %0, %1, %cst {dimension_numbers = #tpu.dot_dimension_numbers<[1], [0], [0], [1], [0, 0, 1, 1], [], []>} : vector<8x128xf32>, vector<128x512xf32>, vector<8x512xf32> -> vector<8x512xf32>
    %c0_i32 = arith.constant 0 : i32
    %3 = arith.cmpi eq, %arg1, %c0_i32 : i32
    %4 = arith.extui %3 : i1 to i32
    %c0_i32_3 = arith.constant 0 : i32
    %5 = arith.cmpi ne, %4, %c0_i32_3 : i32
    scf.if %5 {
      %c0_8 = arith.constant 0 : index
      %c0_9 = arith.constant 0 : index
      %12 = vector.load %arg12[%c0_8, %c0_9] : memref<8x512xf32, #tpu.memory_space<vmem>>, vector<8x512xf32>
      tpu.vector_store %arg12[%c0_8, %c0_9], %2 {strides = array<i32>} : memref<8x512xf32, #tpu.memory_space<vmem>>, vector<8x512xf32>,
    } else {
    }
    %c0_i32_4 = arith.constant 0 : i32
    %6 = arith.cmpi sgt, %arg1, %c0_i32_4 : i32
    %7 = arith.extui %6 : i1 to i32
    %c0_i32_5 = arith.constant 0 : i32
    %8 = arith.cmpi ne, %7, %c0_i32_5 : i32
    scf.if %8 {
      %c0_8 = arith.constant 0 : index
      %c0_9 = arith.constant 0 : index
      %12 = vector.load %arg12[%c0_8, %c0_9] : memref<8x512xf32, #tpu.memory_space<vmem>>, vector<8x512xf32>
      %13 = arith.addf %12, %2 : vector<8x512xf32>
      %c0_10 = arith.constant 0 : index
      %c0_11 = arith.constant 0 : index
      %14 = vector.load %arg12[%c0_10, %c0_11] : memref<8x512xf32, #tpu.memory_space<vmem>>, vector<8x512xf32>
      tpu.vector_store %arg12[%c0_10, %c0_11], %13 {strides = array<i32>} : memref<8x512xf32, #tpu.memory_space<vmem>>, vector<8x512xf32>,
    } else {
    }
    %c0_i32_6 = arith.constant 0 : i32
    %9 = arith.cmpi eq, %arg1, %c0_i32_6 : i32
    %10 = arith.extui %9 : i1 to i32
    %c0_i32_7 = arith.constant 0 : i32
    %11 = arith.cmpi ne, %10, %c0_i32_7 : i32
    scf.if %11 {
      %c0_8 = arith.constant 0 : index
      %c0_9 = arith.constant 0 : index
      %12 = vector.load %arg12[%c0_8, %c0_9] : memref<8x512xf32, #tpu.memory_space<vmem>>, vector<8x512xf32>
      %c0_10 = arith.constant 0 : index
      %c0_11 = arith.constant 0 : index
      %13 = vector.load %arg4[%c0_10, %c0_11] : memref<1x512xf32, #tpu.memory_space<vmem>>, vector<1x512xf32>
      %14 = vector.broadcast %13 : vector<1x512xf32> to vector<8x512xf32>
      %15 = arith.addf %12, %14 : vector<8x512xf32>
      %cst_12 = arith.constant 0.000000e+00 : f32
      %16 = vector.broadcast %cst_12 : f32 to vector<8x512xf32>
      %17 = arith.cmpf oge, %15, %16 : vector<8x512xf32>
      %cst_13 = arith.constant 2.000000e-01 : f32
      %18 = vector.broadcast %cst_13 : f32 to vector<8x512xf32>
      %19 = arith.mulf %18, %15 : vector<8x512xf32>
      %20 = arith.select %17, %15, %19 : vector<8x512xi1>, vector<8x512xf32>
      %c0_14 = arith.constant 0 : index
      %c0_15 = arith.constant 0 : index
      %21 = vector.load %arg5[%c0_14, %c0_15] : memref<512x256xf32, #tpu.memory_space<vmem>>, vector<512x256xf32>
      %cst_16 = arith.constant dense<0.000000e+00> : vector<8x256xf32>
      %22 = tpu.matmul %20, %21, %cst_16 {dimension_numbers = #tpu.dot_dimension_numbers<[1], [0], [0], [1], [0, 0, 1, 1], [], []>} : vector<8x512xf32>, vector<512x256xf32>, vector<8x256xf32> -> vector<8x256xf32>
      %c0_17 = arith.constant 0 : index
      %c0_18 = arith.constant 0 : index
      %23 = vector.load %arg6[%c0_17, %c0_18] : memref<1x256xf32, #tpu.memory_space<vmem>>, vector<1x256xf32>
      %24 = vector.broadcast %23 : vector<1x256xf32> to vector<8x256xf32>
      %25 = arith.addf %22, %24 : vector<8x256xf32>
      %cst_19 = arith.constant 0.000000e+00 : f32
      %26 = vector.broadcast %cst_19 : f32 to vector<8x256xf32>
      %27 = arith.cmpf oge, %25, %26 : vector<8x256xf32>
      %cst_20 = arith.constant 2.000000e-01 : f32
      %28 = vector.broadcast %cst_20 : f32 to vector<8x256xf32>
      %29 = arith.mulf %28, %25 : vector<8x256xf32>
      %30 = arith.select %27, %25, %29 : vector<8x256xi1>, vector<8x256xf32>
      %c0_21 = arith.constant 0 : index
      %c0_22 = arith.constant 0 : index
      %31 = vector.load %arg7[%c0_21, %c0_22] : memref<256x128xf32, #tpu.memory_space<vmem>>, vector<256x128xf32>
      %cst_23 = arith.constant dense<0.000000e+00> : vector<8x128xf32>
      %32 = tpu.matmul %30, %31, %cst_23 {dimension_numbers = #tpu.dot_dimension_numbers<[1], [0], [0], [1], [0, 0, 1, 1], [], []>} : vector<8x256xf32>, vector<256x128xf32>, vector<8x128xf32> -> vector<8x128xf32>
      %c0_24 = arith.constant 0 : index
      %c0_25 = arith.constant 0 : index
      %33 = vector.load %arg8[%c0_24, %c0_25] : memref<1x128xf32, #tpu.memory_space<vmem>>, vector<1x128xf32>
      %34 = vector.broadcast %33 : vector<1x128xf32> to vector<8x128xf32>
      %35 = arith.addf %32, %34 : vector<8x128xf32>
      %cst_26 = arith.constant 0.000000e+00 : f32
      %36 = vector.broadcast %cst_26 : f32 to vector<8x128xf32>
      %37 = arith.cmpf oge, %35, %36 : vector<8x128xf32>
      %cst_27 = arith.constant 2.000000e-01 : f32
      %38 = vector.broadcast %cst_27 : f32 to vector<8x128xf32>
      %39 = arith.mulf %38, %35 : vector<8x128xf32>
      %40 = arith.select %37, %35, %39 : vector<8x128xi1>, vector<8x128xf32>
      %c0_28 = arith.constant 0 : index
      %c0_29 = arith.constant 0 : index
      %41 = vector.load %arg9[%c0_28, %c0_29] : memref<1x128xf32, #tpu.memory_space<vmem>>, vector<1x128xf32>
      %42 = vector.broadcast %41 : vector<1x128xf32> to vector<8x128xf32>
      %43 = arith.mulf %40, %42 : vector<8x128xf32>
      %cst_30 = arith.constant dense<0.000000e+00> : vector<8xf32>
      %44 = vector.multi_reduction <add>, %43, %cst_30 [1] : vector<8x128xf32> to vector<8xf32>
      %45 = vector.shape_cast %44 : vector<8xf32> to vector<8x1xf32>
      %c0_31 = arith.constant 0 : index
      %46 = memref.load %arg10[%c0_31] : memref<1xf32, #tpu.memory_space<smem>>
      %47 = vector.broadcast %46 : f32 to vector<8x1xf32>
      %48 = arith.addf %45, %47 : vector<8x1xf32>
      %c0_32 = arith.constant 0 : index
      %c0_33 = arith.constant 0 : index
      %49 = vector.load %arg11[%c0_32, %c0_33] : memref<8x1xf32, #tpu.memory_space<vmem>>, vector<8x1xf32>
      tpu.vector_store %arg11[%c0_32, %c0_33], %48 {strides = array<i32>} : memref<8x1xf32, #tpu.memory_space<vmem>>, vector<8x1xf32>,
    } else {
    }
    return
  }
  func.func @transform_0(%arg0: i32, %arg1: i32) -> (i32, i32) {
    %c0_i32 = arith.constant 0 : i32
    return %arg0, %arg1 : i32, i32
  }
  func.func @transform_1(%arg0: i32, %arg1: i32) -> (i32, i32) {
    %c0_i32 = arith.constant 0 : i32
    %c0_i32_0 = arith.constant 0 : i32
    return %arg1, %c0_i32 : i32, i32
  }
  func.func @transform_2(%arg0: i32, %arg1: i32) -> (i32, i32) {
    %c0_i32 = arith.constant 0 : i32
    %c0_i32_0 = arith.constant 0 : i32
    %c0_i32_1 = arith.constant 0 : i32
    return %c0_i32, %c0_i32_0 : i32, i32
  }
  func.func @transform_3(%arg0: i32, %arg1: i32) -> (i32, i32) {
    %c0_i32 = arith.constant 0 : i32
    %c0_i32_0 = arith.constant 0 : i32
    %c0_i32_1 = arith.constant 0 : i32
    return %c0_i32, %c0_i32_0 : i32, i32
  }
  func.func @transform_4(%arg0: i32, %arg1: i32) -> (i32, i32) {
    %c0_i32 = arith.constant 0 : i32
    %c0_i32_0 = arith.constant 0 : i32
    %c0_i32_1 = arith.constant 0 : i32
    return %c0_i32, %c0_i32_0 : i32, i32
  }
  func.func @transform_5(%arg0: i32, %arg1: i32) -> (i32, i32) {
    %c0_i32 = arith.constant 0 : i32
    %c0_i32_0 = arith.constant 0 : i32
    %c0_i32_1 = arith.constant 0 : i32
    return %c0_i32, %c0_i32_0 : i32, i32
  }
  func.func @transform_6(%arg0: i32, %arg1: i32) -> (i32, i32) {
    %c0_i32 = arith.constant 0 : i32
    %c0_i32_0 = arith.constant 0 : i32
    %c0_i32_1 = arith.constant 0 : i32
    return %c0_i32, %c0_i32_0 : i32, i32
  }
  func.func @transform_7(%arg0: i32, %arg1: i32) -> (i32, i32) {
    %c0_i32 = arith.constant 0 : i32
    %c0_i32_0 = arith.constant 0 : i32
    %c0_i32_1 = arith.constant 0 : i32
    return %c0_i32, %c0_i32_0 : i32, i32
  }
  func.func @transform_8(%arg0: i32, %arg1: i32) -> i32 {
    %c0_i32 = arith.constant 0 : i32
    %c0_i32_0 = arith.constant 0 : i32
    return %c0_i32 : i32
  }
  func.func @transform_9(%arg0: i32, %arg1: i32) -> (i32, i32) {
    %c0_i32 = arith.constant 0 : i32
    %c0_i32_0 = arith.constant 0 : i32
    return %arg0, %c0_i32 : i32, i32
  }
}

</mosaic_0001>

<llo_original>
// kernel: tpu_custom_call.1
$region0: #{tpu_custom_call.1}
  #allocation0 [shape = 'u32[]', space=smem, size = 0x4, offset = 0x4, fixed_abs, tag = 'smem constant byte address 0x4 - core index']
  #allocation1 [shape = 'u32[144,128]{1,0:T(1,128)}', space=vmem, size = 0x12000, scoped, tag = 'internal scratch']
  #allocation2 [shape = 'f32[8,512]{1,0:T(8,128)}', space=vmem, size = 0x4000, scoped, tag = 'scratch operand']
  #allocation3 [shape = 'f32[1]{0:T(128)S(6)}', space=smem, size = 0x200, scoped, tag = 'scoped memory for tpu_custom_call.1']
  %s0 = inlined_call_operand.hbm [shape: f32[8,128], index: 0, kind: input, shape index: {}]
  %s1 = inlined_call_operand.hbm [shape: f32[128,512], index: 1, kind: input, shape index: {}]
  %s2 = inlined_call_operand.vmem [shape: f32[1,512], index: 2, kind: input, shape index: {}]
  %s3 = inlined_call_operand.hbm [shape: f32[512,256], index: 3, kind: input, shape index: {}]
  %s4 = inlined_call_operand.vmem [shape: f32[1,256], index: 4, kind: input, shape index: {}]
  %s5 = inlined_call_operand.hbm [shape: f32[256,128], index: 5, kind: input, shape index: {}]
  %s6 = inlined_call_operand.vmem [shape: f32[1,128], index: 6, kind: input, shape index: {}]
  %s7 = inlined_call_operand.vmem [shape: f32[1,128], index: 7, kind: input, shape index: {}]
  %s8 = inlined_call_operand.<no memory space> [shape: f32[1], index: 8, kind: input, shape index: {}]
  %s9 = inlined_call_operand.vmem [shape: f32[8,1], index: 9, kind: output, shape index: {}]
  %s10 = sld [smem:[#allocation0]]
  $region74: #{tpu_custom_call.1} parent=0
    _
  %s12 = ssub.s32 1, %s10
  %s13 = scalar_select 0, %s12, %s10
  %14 = sst [smem:[#allocation3]] %s8
  $region1: #{tpu_custom_call.1} parent=0
    #allocation4 [shape = 'u8[4096]{0}', space=vmem, size = 0x1000, scoped, tag = 'input window, operand 0, single buffered']
    #allocation5 [shape = 's32[1]{0}', space=sflag, size = 0x4, scoped, tag = 'scoped memory for tpu_custom_call.1']
    #allocation6 [shape = 'u8[262144]{0}', space=vmem, size = 0x40000, scoped, tag = 'input window, operand 1, single buffered']
    #allocation7 [shape = 's32[1]{0}', space=sflag, size = 0x4, scoped, tag = 'scoped memory for tpu_custom_call.1']
    #allocation8 [shape = 'u8[524288]{0}', space=vmem, size = 0x80000, scoped, tag = 'input window, operand 3, single buffered']
    #allocation9 [shape = 'u8[131072]{0}', space=vmem, size = 0x20000, scoped, tag = 'input window, operand 5, single buffered']
    #allocation10 [shape = 's32[1]{0}', space=sflag, size = 0x4, scoped, tag = 'scoped memory for tpu_custom_call.1']
    %15 = vsyncpa [#allocation5], 0
    %16 = vsyncpa [#allocation7], 0
    %17 = vsyncpa [#allocation10], 0
    // Predicated region
    $region2: #{tpu_custom_call.1} parent=1 // pred_check
      _
    $region3: #{tpu_custom_call.1} parent=1 // pred_check_branch
      %19 = sbr.rel (0) target = $region5
    $region4: #{tpu_custom_call.1} parent=1 // pred_region
      %s21 = ssub.s32 128, 128
      %22 = vsyncadd [#allocation5], %s21
      %s24 = sshll.u32 [#allocation4], 4
      %s25 = int_to_ptr.vmem [resolvable:$true] %s24
      %27 = dma.hbm_to_vmem [thread:$0]  %s0, 128, %s25, [#allocation5]
    $region5: #{tpu_custom_call.1} parent=1 // pred_fallthru
      _
    // Predicated region
    $region6: #{tpu_custom_call.1} parent=1 // pred_check
      _
    $region7: #{tpu_custom_call.1} parent=1 // pred_check_branch
      %29 = sbr.rel (0) target = $region9
    $region8: #{tpu_custom_call.1} parent=1 // pred_region
      %s31 = ssub.s32 8192, 8192
      %32 = vsyncadd [#allocation7], %s31
      %s33 = sshll.u32 [#allocation6], 4
      %s34 = int_to_ptr.vmem [resolvable:$true] %s33
      %39 = dma.hbm_to_vmem [thread:$0]  %s1, 8192, %s34, [#allocation7], 512, 512, 32
    $region9: #{tpu_custom_call.1} parent=1 // pred_fallthru
      _
    // Predicated region
    $region10: #{tpu_custom_call.1} parent=1 // pred_check
      _
    $region11: #{tpu_custom_call.1} parent=1 // pred_check_branch
      %41 = sbr.rel (0) target = $region13
    $region12: #{tpu_custom_call.1} parent=1 // pred_region
      _
    $region13: #{tpu_custom_call.1} parent=1 // pred_fallthru
      _
    // Predicated region
    $region14: #{tpu_custom_call.1} parent=1 // pred_check
      _
    $region15: #{tpu_custom_call.1} parent=1 // pred_check_branch
      %43 = sbr.rel (0) target = $region17
    $region16: #{tpu_custom_call.1} parent=1 // pred_region
      %s45 = ssub.s32 16384, 16384
      %46 = vsyncadd [#allocation7], %s45
      %s47 = sshll.u32 [#allocation8], 4
      %s48 = int_to_ptr.vmem [resolvable:$true] %s47
      %53 = dma.hbm_to_vmem [thread:$0]  %s3, 16384, %s48, [#allocation7], 256, 256, 16
    $region17: #{tpu_custom_call.1} parent=1 // pred_fallthru
      _
    // Predicated region
    $region18: #{tpu_custom_call.1} parent=1 // pred_check
      _
    $region19: #{tpu_custom_call.1} parent=1 // pred_check_branch
      %55 = sbr.rel (0) target = $region21
    $region20: #{tpu_custom_call.1} parent=1 // pred_region
      _
    $region21: #{tpu_custom_call.1} parent=1 // pred_fallthru
      _
    // Predicated region
    $region22: #{tpu_custom_call.1} parent=1 // pred_check
      _
    $region23: #{tpu_custom_call.1} parent=1 // pred_check_branch
      %57 = sbr.rel (0) target = $region25
    $region24: #{tpu_custom_call.1} parent=1 // pred_region
      %s59 = ssub.s32 4096, 4096
      %60 = vsyncadd [#allocation10], %s59
      %s61 = sshll.u32 [#allocation9], 4
      %s62 = int_to_ptr.vmem [resolvable:$true] %s61
      %67 = dma.hbm_to_vmem [thread:$0]  %s5, 4096, %s62, [#allocation10], 128, 128, 8
    $region25: #{tpu_custom_call.1} parent=1 // pred_fallthru
      _
    // Predicated region
    $region26: #{tpu_custom_call.1} parent=1 // pred_check
      _
    $region27: #{tpu_custom_call.1} parent=1 // pred_check_branch
      %69 = sbr.rel (0) target = $region29
    $region28: #{tpu_custom_call.1} parent=1 // pred_region
      _
    $region29: #{tpu_custom_call.1} parent=1 // pred_fallthru
      _
    // Predicated region
    $region30: #{tpu_custom_call.1} parent=1 // pred_check
      _
    $region31: #{tpu_custom_call.1} parent=1 // pred_check_branch
      %71 = sbr.rel (0) target = $region33
    $region32: #{tpu_custom_call.1} parent=1 // pred_region
      _
    $region33: #{tpu_custom_call.1} parent=1 // pred_fallthru
      _
    // Predicated region
    $region34: #{tpu_custom_call.1} parent=1 // pred_check
      _
    $region35: #{tpu_custom_call.1} parent=1 // pred_check_branch
      %73 = sbr.rel (0) target = $region37
    $region36: #{tpu_custom_call.1} parent=1 // pred_region
      _
    $region37: #{tpu_custom_call.1} parent=1 // pred_fallthru
      _
    // Predicated region
    $region38: #{tpu_custom_call.1} parent=1 // pred_check
      _
    $region39: #{tpu_custom_call.1} parent=1 // pred_check_branch
      %75 = sbr.rel (0) target = $region41
    $region40: #{tpu_custom_call.1} parent=1 // pred_region
      %76 = dma.done [#allocation5], 128
    $region41: #{tpu_custom_call.1} parent=1 // pred_fallthru
      _
    // Predicated region
    $region42: #{tpu_custom_call.1} parent=1 // pred_check
      _
    $region43: #{tpu_custom_call.1} parent=1 // pred_check_branch
      %78 = sbr.rel (0) target = $region45
    $region44: #{tpu_custom_call.1} parent=1 // pred_region
      %79 = dma.done [#allocation7], 8192
    $region45: #{tpu_custom_call.1} parent=1 // pred_fallthru
      _
    // Predicated region
    $region46: #{tpu_custom_call.1} parent=1 // pred_check
      _
    $region47: #{tpu_custom_call.1} parent=1 // pred_check_branch
      %81 = sbr.rel (0) target = $region49
    $region48: #{tpu_custom_call.1} parent=1 // pred_region
      %82 = dma.done [#allocation7], 16384
    $region49: #{tpu_custom_call.1} parent=1 // pred_fallthru
      _
    // Predicated region
    $region50: #{tpu_custom_call.1} parent=1 // pred_check
      _
    $region51: #{tpu_custom_call.1} parent=1 // pred_check_branch
      %84 = sbr.rel (0) target = $region53
    $region52: #{tpu_custom_call.1} parent=1 // pred_region
      %85 = dma.done [#allocation10], 4096
    $region53: #{tpu_custom_call.1} parent=1 // pred_fallthru
      _
    %v86 = vld [vmem:[#allocation4] sm:$0xff]
    %v87 = vld [vmem:[#allocation6] sm:$0xff]
    %v88 = vld [vmem:[#allocation6 + $0x8] sm:$0xff]
    %v89 = vld [vmem:[#allocation6 + $0x10] sm:$0xff]
    %v90 = vld [vmem:[#allocation6 + $0x18] sm:$0xff]
    %v91 = vld [vmem:[#allocation6 + $0x20] sm:$0xff]
    %v92 = vld [vmem:[#allocation6 + $0x28] sm:$0xff]
    %v93 = vld [vmem:[#allocation6 + $0x30] sm:$0xff]
    %v94 = vld [vmem:[#allocation6 + $0x38] sm:$0xff]
    %v95 = vld [vmem:[#allocation6 + $0x40] sm:$0xff]
    %v96 = vld [vmem:[#allocation6 + $0x48] sm:$0xff]
    %v97 = vld [vmem:[#allocation6 + $0x50] sm:$0xff]
    %v98 = vld [vmem:[#allocation6 + $0x58] sm:$0xff]
    %v99 = vld [vmem:[#allocation6 + $0x60] sm:$0xff]
    %v100 = vld [vmem:[#allocation6 + $0x68] sm:$0xff]
    %v101 = vld [vmem:[#allocation6 + $0x70] sm:$0xff]
    %v102 = vld [vmem:[#allocation6 + $0x78] sm:$0xff]
    %v103 = vld [vmem:[#allocation6 + $0x80] sm:$0xff]
    %v104 = vld [vmem:[#allocation6 + $0x88] sm:$0xff]
    %v105 = vld [vmem:[#allocation6 + $0x90] sm:$0xff]
    %v106 = vld [vmem:[#allocation6 + $0x98] sm:$0xff]
    %v107 = vld [vmem:[#allocation6 + $0xa0] sm:$0xff]
    %v108 = vld [vmem:[#allocation6 + $0xa8] sm:$0xff]
    %v109 = vld [vmem:[#allocation6 + $0xb0] sm:$0xff]
    %v110 = vld [vmem:[#allocation6 + $0xb8] sm:$0xff]
    %v111 = vld [vmem:[#allocation6 + $0xc0] sm:$0xff]
    %v112 = vld [vmem:[#allocation6 + $0xc8] sm:$0xff]
    %v113 = vld [vmem:[#allocation6 + $0xd0] sm:$0xff]
    %v114 = vld [vmem:[#allocation6 + $0xd8] sm:$0xff]
    %v115 = vld [vmem:[#allocation6 + $0xe0] sm:$0xff]
    %v116 = vld [vmem:[#allocation6 + $0xe8] sm:$0xff]
    %v117 = vld [vmem:[#allocation6 + $0xf0] sm:$0xff]
    %v118 = vld [vmem:[#allocation6 + $0xf8] sm:$0xff]
    %v119 = vld [vmem:[#allocation6 + $0x100] sm:$0xff]
    %v120 = vld [vmem:[#allocation6 + $0x108] sm:$0xff]
    %v121 = vld [vmem:[#allocation6 + $0x110] sm:$0xff]
    %v122 = vld [vmem:[#allocation6 + $0x118] sm:$0xff]
    %v123 = vld [vmem:[#allocation6 + $0x120] sm:$0xff]
    %v124 = vld [vmem:[#allocation6 + $0x128] sm:$0xff]
    %v125 = vld [vmem:[#allocation6 + $0x130] sm:$0xff]
    %v126 = vld [vmem:[#allocation6 + $0x138] sm:$0xff]
    %v127 = vld [vmem:[#allocation6 + $0x140] sm:$0xff]
    %v128 = vld [vmem:[#allocation6 + $0x148] sm:$0xff]
    %v129 = vld [vmem:[#allocation6 + $0x150] sm:$0xff]
    %v130 = vld [vmem:[#allocation6 + $0x158] sm:$0xff]
    %v131 = vld [vmem:[#allocation6 + $0x160] sm:$0xff]
    %v132 = vld [vmem:[#allocation6 + $0x168] sm:$0xff]
    %v133 = vld [vmem:[#allocation6 + $0x170] sm:$0xff]
    %v134 = vld [vmem:[#allocation6 + $0x178] sm:$0xff]
    %v135 = vld [vmem:[#allocation6 + $0x180] sm:$0xff]
    %v136 = vld [vmem:[#allocation6 + $0x188] sm:$0xff]
    %v137 = vld [vmem:[#allocation6 + $0x190] sm:$0xff]
    %v138 = vld [vmem:[#allocation6 + $0x198] sm:$0xff]
    %v139 = vld [vmem:[#allocation6 + $0x1a0] sm:$0xff]
    %v140 = vld [vmem:[#allocation6 + $0x1a8] sm:$0xff]
    %v141 = vld [vmem:[#allocation6 + $0x1b0] sm:$0xff]
    %v142 = vld [vmem:[#allocation6 + $0x1b8] sm:$0xff]
    %v143 = vld [vmem:[#allocation6 + $0x1c0] sm:$0xff]
    %v144 = vld [vmem:[#allocation6 + $0x1c8] sm:$0xff]
    %v145 = vld [vmem:[#allocation6 + $0x1d0] sm:$0xff]
    %v146 = vld [vmem:[#allocation6 + $0x1d8] sm:$0xff]
    %v147 = vld [vmem:[#allocation6 + $0x1e0] sm:$0xff]
    %v148 = vld [vmem:[#allocation6 + $0x1e8] sm:$0xff]
    %v149 = vld [vmem:[#allocation6 + $0x1f0] sm:$0xff]
    %v150 = vld [vmem:[#allocation6 + $0x1f8] sm:$0xff]
    %151 = vmatprep.subr.mxu0 %v88
    %152 = vmatpush1.msra.mxu0 %v87
    %153 = vmatprep.subr.mxu0 %v92
    %154 = vmatpush1.msra.mxu0 %v91
    %155 = vmatprep.subr.mxu0 %v96
    %156 = vmatpush1.msra.mxu0 %v95
    %157 = vmatprep.subr.mxu0 %v100
    %158 = vmatpush1.msra.mxu0 %v99
    %159 = vmatprep.subr.mxu0 %v104
    %160 = vmatpush1.msra.mxu0 %v103
    %161 = vmatprep.subr.mxu0 %v108
    %162 = vmatpush1.msra.mxu0 %v107
    %163 = vmatprep.subr.mxu0 %v112
    %164 = vmatpush1.msra.mxu0 %v111
    %165 = vmatprep.subr.mxu0 %v116
    %166 = vmatpush1.msra.mxu0 %v115
    %167 = vmatprep.subr.mxu0 %v120
    %168 = vmatpush1.msra.mxu0 %v119
    %169 = vmatprep.subr.mxu0 %v124
    %170 = vmatpush1.msra.mxu0 %v123
    %171 = vmatprep.subr.mxu0 %v128
    %172 = vmatpush1.msra.mxu0 %v127
    %173 = vmatprep.subr.mxu0 %v132
    %174 = vmatpush1.msra.mxu0 %v131
    %175 = vmatprep.subr.mxu0 %v136
    %176 = vmatpush1.msra.mxu0 %v135
    %177 = vmatprep.subr.mxu0 %v140
    %178 = vmatpush1.msra.mxu0 %v139
    %179 = vmatprep.subr.mxu0 %v144
    %180 = vmatpush1.msra.mxu0 %v143
    %181 = vmatprep.subr.mxu0 %v148
    %182 = vmatpush1.msra.mxu0 %v147
    %183 = vmatprep.subr.mxu0 0.0
    %184 = vmatpush1.msra.mxu0 0.0
    %185 = vmatprep.subr.mxu0 0.0
    %186 = vmatpush1.msra.mxu0 0.0
    %187 = vmatprep.subr.mxu0 0.0
    %188 = vmatpush1.msra.mxu0 0.0
    %189 = vmatprep.subr.mxu0 0.0
    %190 = vmatpush1.msra.mxu0 0.0
    %191 = vmatprep.subr.mxu0 0.0
    %192 = vmatpush1.msra.mxu0 0.0
    %193 = vmatprep.subr.mxu0 0.0
    %194 = vmatpush1.msra.mxu0 0.0
    %195 = vmatprep.subr.mxu0 0.0
    %196 = vmatpush1.msra.mxu0 0.0
    %197 = vmatprep.subr.mxu0 0.0
    %198 = vmatpush1.msra.mxu0 0.0
    %199 = vmatprep.subr.mxu0 0.0
    %200 = vmatpush1.msra.mxu0 0.0
    %201 = vmatprep.subr.mxu0 0.0
    %202 = vmatpush1.msra.mxu0 0.0
    %203 = vmatprep.subr.mxu0 0.0
    %204 = vmatpush1.msra.mxu0 0.0
    %205 = vmatprep.subr.mxu0 0.0
    %206 = vmatpush1.msra.mxu0 0.0
    %207 = vmatprep.subr.mxu0 0.0
    %208 = vmatpush1.msra.mxu0 0.0
    %209 = vmatprep.subr.mxu0 0.0
    %210 = vmatpush1.msra.mxu0 0.0
    %211 = vmatprep.subr.mxu0 0.0
    %212 = vmatpush1.msra.mxu0 0.0
    %213 = vmatprep.subr.mxu0 0.0
    %214 = vmatpush1.msra.mxu0 0.0
    %215 = vmatprep.mubr.f32.mxu0 0.0
    %216 = vmatmul.mubr.f32.gmra.mrb[0].mxu0 %v86
    %v217 = vpop.f32.mrb[0].mxu0
    %v218 = vadd.f32 0.0, %v217
    %v219 = vpop.f32.mrb[0].mxu0
    %v220 = vadd.f32 0.0, %v219
    %221 = vdwg.mxu0
    %222 = vmatprep.subr.mxu0 %v90
    %223 = vmatpush1.msra.mxu0 %v89
    %224 = vmatprep.subr.mxu0 %v94
    %225 = vmatpush1.msra.mxu0 %v93
    %226 = vmatprep.subr.mxu0 %v98
    %227 = vmatpush1.msra.mxu0 %v97
    %228 = vmatprep.subr.mxu0 %v102
    %229 = vmatpush1.msra.mxu0 %v101
    %230 = vmatprep.subr.mxu0 %v106
    %231 = vmatpush1.msra.mxu0 %v105
    %232 = vmatprep.subr.mxu0 %v110
    %233 = vmatpush1.msra.mxu0 %v109
    %234 = vmatprep.subr.mxu0 %v114
    %235 = vmatpush1.msra.mxu0 %v113
    %236 = vmatprep.subr.mxu0 %v118
    %237 = vmatpush1.msra.mxu0 %v117
    %238 = vmatprep.subr.mxu0 %v122
    %239 = vmatpush1.msra.mxu0 %v121
    %240 = vmatprep.subr.mxu0 %v126
    %241 = vmatpush1.msra.mxu0 %v125
    %242 = vmatprep.subr.mxu0 %v130
    %243 = vmatpush1.msra.mxu0 %v129
    %244 = vmatprep.subr.mxu0 %v134
    %245 = vmatpush1.msra.mxu0 %v133
    %246 = vmatprep.subr.mxu0 %v138
    %247 = vmatpush1.msra.mxu0 %v137
    %248 = vmatprep.subr.mxu0 %v142
    %249 = vmatpush1.msra.mxu0 %v141
    %250 = vmatprep.subr.mxu0 %v146
    %251 = vmatpush1.msra.mxu0 %v145
    %252 = vmatprep.subr.mxu0 %v150
    %253 = vmatpush1.msra.mxu0 %v149
    %254 = vmatprep.subr.mxu0 0.0
    %255 = vmatpush1.msra.mxu0 0.0
    %256 = vmatprep.subr.mxu0 0.0
    %257 = vmatpush1.msra.mxu0 0.0
    %258 = vmatprep.subr.mxu0 0.0
    %259 = vmatpush1.msra.mxu0 0.0
    %260 = vmatprep.subr.mxu0 0.0
    %261 = vmatpush1.msra.mxu0 0.0
    %262 = vmatprep.subr.mxu0 0.0
    %263 = vmatpush1.msra.mxu0 0.0
    %264 = vmatprep.subr.mxu0 0.0
    %265 = vmatpush1.msra.mxu0 0.0
    %266 = vmatprep.subr.mxu0 0.0
    %267 = vmatpush1.msra.mxu0 0.0
    %268 = vmatprep.subr.mxu0 0.0
    %269 = vmatpush1.msra.mxu0 0.0
    %270 = vmatprep.subr.mxu0 0.0
    %271 = vmatpush1.msra.mxu0 0.0
    %272 = vmatprep.subr.mxu0 0.0
    %273 = vmatpush1.msra.mxu0 0.0
    %274 = vmatprep.subr.mxu0 0.0
    %275 = vmatpush1.msra.mxu0 0.0
    %276 = vmatprep.subr.mxu0 0.0
    %277 = vmatpush1.msra.mxu0 0.0
    %278 = vmatprep.subr.mxu0 0.0
    %279 = vmatpush1.msra.mxu0 0.0
    %280 = vmatprep.subr.mxu0 0.0
    %281 = vmatpush1.msra.mxu0 0.0
    %282 = vmatprep.subr.mxu0 0.0
    %283 = vmatpush1.msra.mxu0 0.0
    %284 = vmatprep.subr.mxu0 0.0
    %285 = vmatpush1.msra.mxu0 0.0
    %286 = vmatprep.mubr.f32.mxu0 0.0
    %287 = vmatmul.mubr.f32.gmra.mrb[0].mxu0 %v86
    %v288 = vpop.f32.mrb[0].mxu0
    %v289 = vadd.f32 0.0, %v288
    %v290 = vpop.f32.mrb[0].mxu0
    %v291 = vadd.f32 0.0, %v290
    %292 = vdwg.mxu0
    %p293 = scmp.eq.s32.totalorder 0, 0
    // Predicated region
    $region54: #{tpu_custom_call.1} parent=1 // pred_check
      %p294 = pneg %p293
    $region55: #{tpu_custom_call.1} parent=1 // pred_check_branch
      %296 = sbr.rel (%p294) target = $region57
    $region56: #{tpu_custom_call.1} parent=1 // pred_region
      %297 = vst [vmem:[#allocation2] sm:$0xff] %v218
      %298 = vst [vmem:[#allocation2 + $0x8] sm:$0xff] %v220
      %299 = vst [vmem:[#allocation2 + $0x10] sm:$0xff] %v289
      %300 = vst [vmem:[#allocation2 + $0x18] sm:$0xff] %v291
    $region57: #{tpu_custom_call.1} parent=1 // pred_fallthru
      _
    %p301 = scmp.gt.s32.totalorder 0, 0
    // Predicated region
    $region58: #{tpu_custom_call.1} parent=1 // pred_check
      %p302 = pneg %p301
    $region59: #{tpu_custom_call.1} parent=1 // pred_check_branch
      %304 = sbr.rel (%p302) target = $region61
    $region60: #{tpu_custom_call.1} parent=1 // pred_region
      %v305 = vld [vmem:[#allocation2] sm:$0xff]
      %v306 = vld [vmem:[#allocation2 + $0x8] sm:$0xff]
      %v307 = vld [vmem:[#allocation2 + $0x10] sm:$0xff]
      %v308 = vld [vmem:[#allocation2 + $0x18] sm:$0xff]
      %v309 = vadd.f32 %v305, %v218
      %v310 = vadd.f32 %v306, %v220
      %v311 = vadd.f32 %v307, %v289
      %v312 = vadd.f32 %v308, %v291
      %313 = vst [vmem:[#allocation2] sm:$0xff] %v309
      %314 = vst [vmem:[#allocation2 + $0x8] sm:$0xff] %v310
      %315 = vst [vmem:[#allocation2 + $0x10] sm:$0xff] %v311
      %316 = vst [vmem:[#allocation2 + $0x18] sm:$0xff] %v312
    $region61: #{tpu_custom_call.1} parent=1 // pred_fallthru
      _
    // Predicated region
    $region62: #{tpu_custom_call.1} parent=1 // pred_check
      %p317 = pneg %p293
    $region63: #{tpu_custom_call.1} parent=1 // pred_check_branch
      %319 = sbr.rel (%p317) target = $region65
    $region64: #{tpu_custom_call.1} parent=1 // pred_region
      %v320 = vld [vmem:[#allocation2] sm:$0xff]
      %v321 = vld [vmem:[#allocation2 + $0x8] sm:$0xff]
      %v322 = vld [vmem:[#allocation2 + $0x10] sm:$0xff]
      %v323 = vld [vmem:[#allocation2 + $0x18] sm:$0xff]
      %v324 = vld [vmem:[%s2] sm:$0xf]
      %v326 = vlaneseq
      %v327 = vshrl.u32 %v326, 7
      %v328 = vsub.s32 0, %v327
      %v329 = vrot.slane %v324, %v328
      %v330 = vlaneseq
      %v331 = vshrl.u32 %v330, 7
      %v332 = vsub.s32 1, %v331
      %v333 = vrot.slane %v324, %v332
      %v334 = vlaneseq
      %v335 = vshrl.u32 %v334, 7
      %v336 = vsub.s32 2, %v335
      %v337 = vrot.slane %v324, %v336
      %v338 = vlaneseq
      %v339 = vshrl.u32 %v338, 7
      %v340 = vsub.s32 3, %v339
      %v341 = vrot.slane %v324, %v340
      %v346 = vadd.f32 %v320, %v329
      %v347 = vadd.f32 %v321, %v333
      %v348 = vadd.f32 %v322, %v337
      %v349 = vadd.f32 %v323, %v341
      %vm350 = vcmp.ge.f32.partialorder %v346, 0.0
      %vm351 = vcmp.ge.f32.partialorder %v347, 0.0
      %vm352 = vcmp.ge.f32.partialorder %v348, 0.0
      %vm353 = vcmp.ge.f32.partialorder %v349, 0.0
      %v354 = vmul.f32 %v346, 0.2
      %v355 = vmul.f32 %v347, 0.2
      %v356 = vmul.f32 %v348, 0.2
      %v357 = vmul.f32 %v349, 0.2
      %v358 = vsel %vm350, %v346, %v354
      %v359 = vsel %vm351, %v347, %v355
      %v360 = vsel %vm352, %v348, %v356
      %v361 = vsel %vm353, %v349, %v357
      %v362 = vld [vmem:[#allocation8] sm:$0xff]
      %v363 = vld [vmem:[#allocation8 + $0x8] sm:$0xff]
      %v364 = vld [vmem:[#allocation8 + $0x10] sm:$0xff]
      %v365 = vld [vmem:[#allocation8 + $0x18] sm:$0xff]
      %v366 = vld [vmem:[#allocation8 + $0x20] sm:$0xff]
      %v367 = vld [vmem:[#allocation8 + $0x28] sm:$0xff]
      %v368 = vld [vmem:[#allocation8 + $0x30] sm:$0xff]
      %v369 = vld [vmem:[#allocation8 + $0x38] sm:$0xff]
      %v370 = vld [vmem:[#allocation8 + $0x40] sm:$0xff]
      %v371 = vld [vmem:[#allocation8 + $0x48] sm:$0xff]
      %v372 = vld [vmem:[#allocation8 + $0x50] sm:$0xff]
      %v373 = vld [vmem:[#allocation8 + $0x58] sm:$0xff]
      %v374 = vld [vmem:[#allocation8 + $0x60] sm:$0xff]
      %v375 = vld [vmem:[#allocation8 + $0x68] sm:$0xff]
      %v376 = vld [vmem:[#allocation8 + $0x70] sm:$0xff]
      %v377 = vld [vmem:[#allocation8 + $0x78] sm:$0xff]
      %v378 = vld [vmem:[#allocation8 + $0x80] sm:$0xff]
      %v379 = vld [vmem:[#allocation8 + $0x88] sm:$0xff]
      %v380 = vld [vmem:[#allocation8 + $0x90] sm:$0xff]
      %v381 = vld [vmem:[#allocation8 + $0x98] sm:$0xff]
      %v382 = vld [vmem:[#allocation8 + $0xa0] sm:$0xff]
      %v383 = vld [vmem:[#allocation8 + $0xa8] sm:$0xff]
      %v384 = vld [vmem:[#allocation8 + $0xb0] sm:$0xff]
      %v385 = vld [vmem:[#allocation8 + $0xb8] sm:$0xff]
      %v386 = vld [vmem:[#allocation8 + $0xc0] sm:$0xff]
      %v387 = vld [vmem:[#allocation8 + $0xc8] sm:$0xff]
      %v388 = vld [vmem:[#allocation8 + $0xd0] sm:$0xff]
      %v389 = vld [vmem:[#allocation8 + $0xd8] sm:$0xff]
      %v390 = vld [vmem:[#allocation8 + $0xe0] sm:$0xff]
      %v391 = vld [vmem:[#allocation8 + $0xe8] sm:$0xff]
      %v392 = vld [vmem:[#allocation8 + $0xf0] sm:$0xff]
      %v393 = vld [vmem:[#allocation8 + $0xf8] sm:$0xff]
      %v394 = vld [vmem:[#allocation8 + $0x100] sm:$0xff]
      %v395 = vld [vmem:[#allocation8 + $0x108] sm:$0xff]
      %v396 = vld [vmem:[#allocation8 + $0x110] sm:$0xff]
      %v397 = vld [vmem:[#allocation8 + $0x118] sm:$0xff]
      %v398 = vld [vmem:[#allocation8 + $0x120] sm:$0xff]
      %v399 = vld [vmem:[#allocation8 + $0x128] sm:$0xff]
      %v400 = vld [vmem:[#allocation8 + $0x130] sm:$0xff]
      %v401 = vld [vmem:[#allocation8 + $0x138] sm:$0xff]
      %v402 = vld [vmem:[#allocation8 + $0x140] sm:$0xff]
      %v403 = vld [vmem:[#allocation8 + $0x148] sm:$0xff]
      %v404 = vld [vmem:[#allocation8 + $0x150] sm:$0xff]
      %v405 = vld [vmem:[#allocation8 + $0x158] sm:$0xff]
      %v406 = vld [vmem:[#allocation8 + $0x160] sm:$0xff]
      %v407 = vld [vmem:[#allocation8 + $0x168] sm:$0xff]
      %v408 = vld [vmem:[#allocation8 + $0x170] sm:$0xff]
      %v409 = vld [vmem:[#allocation8 + $0x178] sm:$0xff]
      %v410 = vld [vmem:[#allocation8 + $0x180] sm:$0xff]
      %v411 = vld [vmem:[#allocation8 + $0x188] sm:$0xff]
      %v412 = vld [vmem:[#allocation8 + $0x190] sm:$0xff]
      %v413 = vld [vmem:[#allocation8 + $0x198] sm:$0xff]
      %v414 = vld [vmem:[#allocation8 + $0x1a0] sm:$0xff]
      %v415 = vld [vmem:[#allocation8 + $0x1a8] sm:$0xff]
      %v416 = vld [vmem:[#allocation8 + $0x1b0] sm:$0xff]
      %v417 = vld [vmem:[#allocation8 + $0x1b8] sm:$0xff]
      %v418 = vld [vmem:[#allocation8 + $0x1c0] sm:$0xff]
      %v419 = vld [vmem:[#allocation8 + $0x1c8] sm:$0xff]
      %v420 = vld [vmem:[#allocation8 + $0x1d0] sm:$0xff]
      %v421 = vld [vmem:[#allocation8 + $0x1d8] sm:$0xff]
      %v422 = vld [vmem:[#allocation8 + $0x1e0] sm:$0xff]
      %v423 = vld [vmem:[#allocation8 + $0x1e8] sm:$0xff]
      %v424 = vld [vmem:[#allocation8 + $0x1f0] sm:$0xff]
      %v425 = vld [vmem:[#allocation8 + $0x1f8] sm:$0xff]
      %v426 = vld [vmem:[#allocation8 + $0x200] sm:$0xff]
      %v427 = vld [vmem:[#allocation8 + $0x208] sm:$0xff]
      %v428 = vld [vmem:[#allocation8 + $0x210] sm:$0xff]
      %v429 = vld [vmem:[#allocation8 + $0x218] sm:$0xff]
      %v430 = vld [vmem:[#allocation8 + $0x220] sm:$0xff]
      %v431 = vld [vmem:[#allocation8 + $0x228] sm:$0xff]
      %v432 = vld [vmem:[#allocation8 + $0x230] sm:$0xff]
      %v433 = vld [vmem:[#allocation8 + $0x238] sm:$0xff]
      %v434 = vld [vmem:[#allocation8 + $0x240] sm:$0xff]
      %v435 = vld [vmem:[#allocation8 + $0x248] sm:$0xff]
      %v436 = vld [vmem:[#allocation8 + $0x250] sm:$0xff]
      %v437 = vld [vmem:[#allocation8 + $0x258] sm:$0xff]
      %v438 = vld [vmem:[#allocation8 + $0x260] sm:$0xff]
      %v439 = vld [vmem:[#allocation8 + $0x268] sm:$0xff]
      %v440 = vld [vmem:[#allocation8 + $0x270] sm:$0xff]
      %v441 = vld [vmem:[#allocation8 + $0x278] sm:$0xff]
      %v442 = vld [vmem:[#allocation8 + $0x280] sm:$0xff]
      %v443 = vld [vmem:[#allocation8 + $0x288] sm:$0xff]
      %v444 = vld [vmem:[#allocation8 + $0x290] sm:$0xff]
      %v445 = vld [vmem:[#allocation8 + $0x298] sm:$0xff]
      %v446 = vld [vmem:[#allocation8 + $0x2a0] sm:$0xff]
      %v447 = vld [vmem:[#allocation8 + $0x2a8] sm:$0xff]
      %v448 = vld [vmem:[#allocation8 + $0x2b0] sm:$0xff]
      %v449 = vld [vmem:[#allocation8 + $0x2b8] sm:$0xff]
      %v450 = vld [vmem:[#allocation8 + $0x2c0] sm:$0xff]
      %v451 = vld [vmem:[#allocation8 + $0x2c8] sm:$0xff]
      %v452 = vld [vmem:[#allocation8 + $0x2d0] sm:$0xff]
      %v453 = vld [vmem:[#allocation8 + $0x2d8] sm:$0xff]
      %v454 = vld [vmem:[#allocation8 + $0x2e0] sm:$0xff]
      %v455 = vld [vmem:[#allocation8 + $0x2e8] sm:$0xff]
      %v456 = vld [vmem:[#allocation8 + $0x2f0] sm:$0xff]
      %v457 = vld [vmem:[#allocation8 + $0x2f8] sm:$0xff]
      %v458 = vld [vmem:[#allocation8 + $0x300] sm:$0xff]
      %v459 = vld [vmem:[#allocation8 + $0x308] sm:$0xff]
      %v460 = vld [vmem:[#allocation8 + $0x310] sm:$0xff]
      %v461 = vld [vmem:[#allocation8 + $0x318] sm:$0xff]
      %v462 = vld [vmem:[#allocation8 + $0x320] sm:$0xff]
      %v463 = vld [vmem:[#allocation8 + $0x328] sm:$0xff]
      %v464 = vld [vmem:[#allocation8 + $0x330] sm:$0xff]
      %v465 = vld [vmem:[#allocation8 + $0x338] sm:$0xff]
      %v466 = vld [vmem:[#allocation8 + $0x340] sm:$0xff]
      %v467 = vld [vmem:[#allocation8 + $0x348] sm:$0xff]
      %v468 = vld [vmem:[#allocation8 + $0x350] sm:$0xff]
      %v469 = vld [vmem:[#allocation8 + $0x358] sm:$0xff]
      %v470 = vld [vmem:[#allocation8 + $0x360] sm:$0xff]
      %v471 = vld [vmem:[#allocation8 + $0x368] sm:$0xff]
      %v472 = vld [vmem:[#allocation8 + $0x370] sm:$0xff]
      %v473 = vld [vmem:[#allocation8 + $0x378] sm:$0xff]
      %v474 = vld [vmem:[#allocation8 + $0x380] sm:$0xff]
      %v475 = vld [vmem:[#allocation8 + $0x388] sm:$0xff]
      %v476 = vld [vmem:[#allocation8 + $0x390] sm:$0xff]
      %v477 = vld [vmem:[#allocation8 + $0x398] sm:$0xff]
      %v478 = vld [vmem:[#allocation8 + $0x3a0] sm:$0xff]
      %v479 = vld [vmem:[#allocation8 + $0x3a8] sm:$0xff]
      %v480 = vld [vmem:[#allocation8 + $0x3b0] sm:$0xff]
      %v481 = vld [vmem:[#allocation8 + $0x3b8] sm:$0xff]
      %v482 = vld [vmem:[#allocation8 + $0x3c0] sm:$0xff]
      %v483 = vld [vmem:[#allocation8 + $0x3c8] sm:$0xff]
      %v484 = vld [vmem:[#allocation8 + $0x3d0] sm:$0xff]
      %v485 = vld [vmem:[#allocation8 + $0x3d8] sm:$0xff]
      %v486 = vld [vmem:[#allocation8 + $0x3e0] sm:$0xff]
      %v487 = vld [vmem:[#allocation8 + $0x3e8] sm:$0xff]
      %v488 = vld [vmem:[#allocation8 + $0x3f0] sm:$0xff]
      %v489 = vld [vmem:[#allocation8 + $0x3f8] sm:$0xff]
      %v490 = vld [vmem:[%s4] sm:$0x3]
      %v492 = vlaneseq
      %v493 = vshrl.u32 %v492, 7
      %v494 = vsub.s32 0, %v493
      %v495 = vrot.slane %v490, %v494
      %v496 = vlaneseq
      %v497 = vshrl.u32 %v496, 7
      %v498 = vsub.s32 1, %v497
      %v499 = vrot.slane %v490, %v498
      %502 = vmatprep.subr.mxu0 %v363
      %503 = vmatpush1.msra.mxu0 %v362
      %504 = vmatprep.subr.mxu0 %v365
      %505 = vmatpush1.msra.mxu0 %v364
      %506 = vmatprep.subr.mxu0 %v367
      %507 = vmatpush1.msra.mxu0 %v366
      %508 = vmatprep.subr.mxu0 %v369
      %509 = vmatpush1.msra.mxu0 %v368
      %510 = vmatprep.subr.mxu0 %v371
      %511 = vmatpush1.msra.mxu0 %v370
      %512 = vmatprep.subr.mxu0 %v373
      %513 = vmatpush1.msra.mxu0 %v372
      %514 = vmatprep.subr.mxu0 %v375
      %515 = vmatpush1.msra.mxu0 %v374
      %516 = vmatprep.subr.mxu0 %v377
      %517 = vmatpush1.msra.mxu0 %v376
      %518 = vmatprep.subr.mxu0 %v379
      %519 = vmatpush1.msra.mxu0 %v378
      %520 = vmatprep.subr.mxu0 %v381
      %521 = vmatpush1.msra.mxu0 %v380
      %522 = vmatprep.subr.mxu0 %v383
      %523 = vmatpush1.msra.mxu0 %v382
      %524 = vmatprep.subr.mxu0 %v385
      %525 = vmatpush1.msra.mxu0 %v384
      %526 = vmatprep.subr.mxu0 %v387
      %527 = vmatpush1.msra.mxu0 %v386
      %528 = vmatprep.subr.mxu0 %v389
      %529 = vmatpush1.msra.mxu0 %v388
      %530 = vmatprep.subr.mxu0 %v391
      %531 = vmatpush1.msra.mxu0 %v390
      %532 = vmatprep.subr.mxu0 %v393
      %533 = vmatpush1.msra.mxu0 %v392
      %534 = vmatprep.subr.mxu0 %v395
      %535 = vmatpush1.msra.mxu0 %v394
      %536 = vmatprep.subr.mxu0 %v397
      %537 = vmatpush1.msra.mxu0 %v396
      %538 = vmatprep.subr.mxu0 %v399
      %539 = vmatpush1.msra.mxu0 %v398
      %540 = vmatprep.subr.mxu0 %v401
      %541 = vmatpush1.msra.mxu0 %v400
      %542 = vmatprep.subr.mxu0 %v403
      %543 = vmatpush1.msra.mxu0 %v402
      %544 = vmatprep.subr.mxu0 %v405
      %545 = vmatpush1.msra.mxu0 %v404
      %546 = vmatprep.subr.mxu0 %v407
      %547 = vmatpush1.msra.mxu0 %v406
      %548 = vmatprep.subr.mxu0 %v409
      %549 = vmatpush1.msra.mxu0 %v408
      %550 = vmatprep.subr.mxu0 %v411
      %551 = vmatpush1.msra.mxu0 %v410
      %552 = vmatprep.subr.mxu0 %v413
      %553 = vmatpush1.msra.mxu0 %v412
      %554 = vmatprep.subr.mxu0 %v415
      %555 = vmatpush1.msra.mxu0 %v414
      %556 = vmatprep.subr.mxu0 %v417
      %557 = vmatpush1.msra.mxu0 %v416
      %558 = vmatprep.subr.mxu0 %v419
      %559 = vmatpush1.msra.mxu0 %v418
      %560 = vmatprep.subr.mxu0 %v421
      %561 = vmatpush1.msra.mxu0 %v420
      %562 = vmatprep.subr.mxu0 %v423
      %563 = vmatpush1.msra.mxu0 %v422
      %564 = vmatprep.subr.mxu0 %v425
      %565 = vmatpush1.msra.mxu0 %v424
      %566 = vmatprep.mubr.f32.mxu0 %v359
      %567 = vmatmul.mubr.f32.gmra.mrb[0].mxu0 %v358
      %v568 = vpop.f32.mrb[0].mxu0
      %v569 = vadd.f32 %v495, %v568
      %v570 = vpop.f32.mrb[0].mxu0
      %v571 = vadd.f32 %v499, %v570
      %572 = vdwg.mxu0
      %573 = vmatprep.subr.mxu0 %v427
      %574 = vmatpush1.msra.mxu0 %v426
      %575 = vmatprep.subr.mxu0 %v429
      %576 = vmatpush1.msra.mxu0 %v428
      %577 = vmatprep.subr.mxu0 %v431
      %578 = vmatpush1.msra.mxu0 %v430
      %579 = vmatprep.subr.mxu0 %v433
      %580 = vmatpush1.msra.mxu0 %v432
      %581 = vmatprep.subr.mxu0 %v435
      %582 = vmatpush1.msra.mxu0 %v434
      %583 = vmatprep.subr.mxu0 %v437
      %584 = vmatpush1.msra.mxu0 %v436
      %585 = vmatprep.subr.mxu0 %v439
      %586 = vmatpush1.msra.mxu0 %v438
      %587 = vmatprep.subr.mxu0 %v441
      %588 = vmatpush1.msra.mxu0 %v440
      %589 = vmatprep.subr.mxu0 %v443
      %590 = vmatpush1.msra.mxu0 %v442
      %591 = vmatprep.subr.mxu0 %v445
      %592 = vmatpush1.msra.mxu0 %v444
      %593 = vmatprep.subr.mxu0 %v447
      %594 = vmatpush1.msra.mxu0 %v446
      %595 = vmatprep.subr.mxu0 %v449
      %596 = vmatpush1.msra.mxu0 %v448
      %597 = vmatprep.subr.mxu0 %v451
      %598 = vmatpush1.msra.mxu0 %v450
      %599 = vmatprep.subr.mxu0 %v453
      %600 = vmatpush1.msra.mxu0 %v452
      %601 = vmatprep.subr.mxu0 %v455
      %602 = vmatpush1.msra.mxu0 %v454
      %603 = vmatprep.subr.mxu0 %v457
      %604 = vmatpush1.msra.mxu0 %v456
      %605 = vmatprep.subr.mxu0 %v459
      %606 = vmatpush1.msra.mxu0 %v458
      %607 = vmatprep.subr.mxu0 %v461
      %608 = vmatpush1.msra.mxu0 %v460
      %609 = vmatprep.subr.mxu0 %v463
      %610 = vmatpush1.msra.mxu0 %v462
      %611 = vmatprep.subr.mxu0 %v465
      %612 = vmatpush1.msra.mxu0 %v464
      %613 = vmatprep.subr.mxu0 %v467
      %614 = vmatpush1.msra.mxu0 %v466
      %615 = vmatprep.subr.mxu0 %v469
      %616 = vmatpush1.msra.mxu0 %v468
      %617 = vmatprep.subr.mxu0 %v471
      %618 = vmatpush1.msra.mxu0 %v470
      %619 = vmatprep.subr.mxu0 %v473
      %620 = vmatpush1.msra.mxu0 %v472
      %621 = vmatprep.subr.mxu0 %v475
      %622 = vmatpush1.msra.mxu0 %v474
      %623 = vmatprep.subr.mxu0 %v477
      %624 = vmatpush1.msra.mxu0 %v476
      %625 = vmatprep.subr.mxu0 %v479
      %626 = vmatpush1.msra.mxu0 %v478
      %627 = vmatprep.subr.mxu0 %v481
      %628 = vmatpush1.msra.mxu0 %v480
      %629 = vmatprep.subr.mxu0 %v483
      %630 = vmatpush1.msra.mxu0 %v482
      %631 = vmatprep.subr.mxu0 %v485
      %632 = vmatpush1.msra.mxu0 %v484
      %633 = vmatprep.subr.mxu0 %v487
      %634 = vmatpush1.msra.mxu0 %v486
      %635 = vmatprep.subr.mxu0 %v489
      %636 = vmatpush1.msra.mxu0 %v488
      %637 = vmatprep.mubr.f32.mxu0 %v361
      %638 = vmatmul.mubr.f32.gmra.mrb[0].mxu0 %v360
      %v639 = vpop.f32.mrb[0].mxu0
      %v640 = vadd.f32 %v569, %v639
      %v641 = vpop.f32.mrb[0].mxu0
      %v642 = vadd.f32 %v571, %v641
      %643 = vdwg.mxu0
      %vm644 = vcmp.ge.f32.partialorder %v640, 0.0
      %vm645 = vcmp.ge.f32.partialorder %v642, 0.0
      %v646 = vmul.f32 %v640, 0.2
      %v647 = vmul.f32 %v642, 0.2
      %v648 = vsel %vm644, %v640, %v646
      %v649 = vsel %vm645, %v642, %v647
      %v650 = vld [vmem:[#allocation9] sm:$0xff]
      %v651 = vld [vmem:[#allocation9 + $0x8] sm:$0xff]
      %v652 = vld [vmem:[#allocation9 + $0x10] sm:$0xff]
      %v653 = vld [vmem:[#allocation9 + $0x18] sm:$0xff]
      %v654 = vld [vmem:[#allocation9 + $0x20] sm:$0xff]
      %v655 = vld [vmem:[#allocation9 + $0x28] sm:$0xff]
      %v656 = vld [vmem:[#allocation9 + $0x30] sm:$0xff]
      %v657 = vld [vmem:[#allocation9 + $0x38] sm:$0xff]
      %v658 = vld [vmem:[#allocation9 + $0x40] sm:$0xff]
      %v659 = vld [vmem:[#allocation9 + $0x48] sm:$0xff]
      %v660 = vld [vmem:[#allocation9 + $0x50] sm:$0xff]
      %v661 = vld [vmem:[#allocation9 + $0x58] sm:$0xff]
      %v662 = vld [vmem:[#allocation9 + $0x60] sm:$0xff]
      %v663 = vld [vmem:[#allocation9 + $0x68] sm:$0xff]
      %v664 = vld [vmem:[#allocation9 + $0x70] sm:$0xff]
      %v665 = vld [vmem:[#allocation9 + $0x78] sm:$0xff]
      %v666 = vld [vmem:[#allocation9 + $0x80] sm:$0xff]
      %v667 = vld [vmem:[#allocation9 + $0x88] sm:$0xff]
      %v668 = vld [vmem:[#allocation9 + $0x90] sm:$0xff]
      %v669 = vld [vmem:[#allocation9 + $0x98] sm:$0xff]
      %v670 = vld [vmem:[#allocation9 + $0xa0] sm:$0xff]
      %v671 = vld [vmem:[#allocation9 + $0xa8] sm:$0xff]
      %v672 = vld [vmem:[#allocation9 + $0xb0] sm:$0xff]
      %v673 = vld [vmem:[#allocation9 + $0xb8] sm:$0xff]
      %v674 = vld [vmem:[#allocation9 + $0xc0] sm:$0xff]
      %v675 = vld [vmem:[#allocation9 + $0xc8] sm:$0xff]
      %v676 = vld [vmem:[#allocation9 + $0xd0] sm:$0xff]
      %v677 = vld [vmem:[#allocation9 + $0xd8] sm:$0xff]
      %v678 = vld [vmem:[#allocation9 + $0xe0] sm:$0xff]
      %v679 = vld [vmem:[#allocation9 + $0xe8] sm:$0xff]
      %v680 = vld [vmem:[#allocation9 + $0xf0] sm:$0xff]
      %v681 = vld [vmem:[#allocation9 + $0xf8] sm:$0xff]
      %v682 = vld [vmem:[%s6] sm:$0x1]
      %v684 = vlaneseq
      %v685 = vshrl.u32 %v684, 7
      %v686 = vsub.s32 0, %v685
      %v687 = vrot.slane %v682, %v686
      %689 = vmatprep.subr.mxu0 0.0
      %690 = vmatpush1.msra.mxu0 %v650
      %691 = vmatprep.subr.mxu0 0.0
      %692 = vmatpush1.msra.mxu0 %v651
      %693 = vmatprep.subr.mxu0 0.0
      %694 = vmatpush1.msra.mxu0 %v652
      %695 = vmatprep.subr.mxu0 0.0
      %696 = vmatpush1.msra.mxu0 %v653
      %697 = vmatprep.subr.mxu0 0.0
      %698 = vmatpush1.msra.mxu0 %v654
      %699 = vmatprep.subr.mxu0 0.0
      %700 = vmatpush1.msra.mxu0 %v655
      %701 = vmatprep.subr.mxu0 0.0
      %702 = vmatpush1.msra.mxu0 %v656
      %703 = vmatprep.subr.mxu0 0.0
      %704 = vmatpush1.msra.mxu0 %v657
      %705 = vmatprep.subr.mxu0 0.0
      %706 = vmatpush1.msra.mxu0 %v658
      %707 = vmatprep.subr.mxu0 0.0
      %708 = vmatpush1.msra.mxu0 %v659
      %709 = vmatprep.subr.mxu0 0.0
      %710 = vmatpush1.msra.mxu0 %v660
      %711 = vmatprep.subr.mxu0 0.0
      %712 = vmatpush1.msra.mxu0 %v661
      %713 = vmatprep.subr.mxu0 0.0
      %714 = vmatpush1.msra.mxu0 %v662
      %715 = vmatprep.subr.mxu0 0.0
      %716 = vmatpush1.msra.mxu0 %v663
      %717 = vmatprep.subr.mxu0 0.0
      %718 = vmatpush1.msra.mxu0 %v664
      %719 = vmatprep.subr.mxu0 0.0
      %720 = vmatpush1.msra.mxu0 %v665
      %721 = vmatprep.subr.mxu0 0.0
      %722 = vmatpush1.msra.mxu0 %v666
      %723 = vmatprep.subr.mxu0 0.0
      %724 = vmatpush1.msra.mxu0 %v667
      %725 = vmatprep.subr.mxu0 0.0
      %726 = vmatpush1.msra.mxu0 %v668
      %727 = vmatprep.subr.mxu0 0.0
      %728 = vmatpush1.msra.mxu0 %v669
      %729 = vmatprep.subr.mxu0 0.0
      %730 = vmatpush1.msra.mxu0 %v670
      %731 = vmatprep.subr.mxu0 0.0
      %732 = vmatpush1.msra.mxu0 %v671
      %733 = vmatprep.subr.mxu0 0.0
      %734 = vmatpush1.msra.mxu0 %v672
      %735 = vmatprep.subr.mxu0 0.0
      %736 = vmatpush1.msra.mxu0 %v673
      %737 = vmatprep.subr.mxu0 0.0
      %738 = vmatpush1.msra.mxu0 %v674
      %739 = vmatprep.subr.mxu0 0.0
      %740 = vmatpush1.msra.mxu0 %v675
      %741 = vmatprep.subr.mxu0 0.0
      %742 = vmatpush1.msra.mxu0 %v676
      %743 = vmatprep.subr.mxu0 0.0
      %744 = vmatpush1.msra.mxu0 %v677
      %745 = vmatprep.subr.mxu0 0.0
      %746 = vmatpush1.msra.mxu0 %v678
      %747 = vmatprep.subr.mxu0 0.0
      %748 = vmatpush1.msra.mxu0 %v679
      %749 = vmatprep.subr.mxu0 0.0
      %750 = vmatpush1.msra.mxu0 %v680
      %751 = vmatprep.subr.mxu0 0.0
      %752 = vmatpush1.msra.mxu0 %v681
      %753 = vmatprep.mubr.f32.mxu0 %v649
      %754 = vmatmul.mubr.f32.gmra.mrb[0].mxu0 %v648
      %v755 = vpop.f32.mrb[0].mxu0
      %v756 = vadd.f32 %v687, %v755
      %v757 = vpop.f32.mrb[0].mxu0
      %758 = vdwg.mxu0
      %vm759 = vcmp.ge.f32.partialorder %v756, 0.0
      %v760 = vmul.f32 %v756, 0.2
      %v761 = vsel %vm759, %v756, %v760
      %v762 = vld [vmem:[%s7] sm:$0x1]
      %v764 = vlaneseq
      %v765 = vshrl.u32 %v764, 7
      %v766 = vsub.s32 0, %v765
      %v767 = vrot.slane %v762, %v766
      %v769 = vmul.f32 %v761, %v767
      %770 = vadd.xlane.f32.xlu0 %v769
      %v771 = vpop.xlane.xlu0 %770
      %s772 = sld [smem:[#allocation3]]
      %v773 = vstv %s772
      %v774 = vadd.f32 %v771, %v773
      %vm775 = vcmask 7168
      %776 = vst.msk [vmem:[%s9] sm:$0xff] %vm775, %v774
    $region65: #{tpu_custom_call.1} parent=1 // pred_fallthru
      _
    // Predicated region
    $region66: #{tpu_custom_call.1} parent=1 // pred_check
      _
    $region67: #{tpu_custom_call.1} parent=1 // pred_check_branch
      %778 = sbr.rel (0) target = $region69
    $region68: #{tpu_custom_call.1} parent=1 // pred_region
      _
    $region69: #{tpu_custom_call.1} parent=1 // pred_fallthru
      _
    // Predicated region
    $region70: #{tpu_custom_call.1} parent=1 // pred_check
      _
    $region71: #{tpu_custom_call.1} parent=1 // pred_check_branch
      %780 = sbr.rel (0) target = $region73
    $region72: #{tpu_custom_call.1} parent=1 // pred_region
      _
    $region73: #{tpu_custom_call.1} parent=1 // pred_fallthru
      _
    %781 = vsyncpa [#allocation5], 1
    %782 = vsyncpa [#allocation7], 1
    %783 = vsyncpa [#allocation10], 1

</llo_original>
